<compile_context>
chip_gen: v5e
topology: v5e:2x2
jax: 0.10.0
libtpu: 0.0.40
codegen_flags: <defaults>
</compile_context>

<pallas_src>
import functools

import jax
import jax.numpy as jnp
from jax.experimental import pallas as pl
from jax.experimental.pallas import tpu as pltpu

_LANE = 128
_SUBLANE = 8
# Only force >=2 grid steps (for v7x 2-TC sharding) if each step still moves
# at least this much HBM traffic; below that, per-step overhead dominates.
_MIN_STEP_HBM_BYTES = 1 << 20


def _round_up(x, m):
    return (x + m - 1) // m * m


def _vmem_budget():
    """Generation-aware (double-buffered block budget, vmem_limit, total VMEM)."""
    total = None
    try:
        total = getattr(pltpu.get_tpu_info(), "vmem_capacity_bytes", None)
    except Exception:
        total = None
    if not total:
        total = 64 * 1024 * 1024          # conservative fallback: v7x physical
    if total >= 100 * 1024 * 1024:        # v5e / v6e: 128 MiB VMEM
        budget, limit = 48 * 1024 * 1024, 96 * 1024 * 1024
    else:                                 # v7x: 64 MiB VMEM -> leave headroom
        budget, limit = 20 * 1024 * 1024, 48 * 1024 * 1024
    return budget, limit, total


def _pick_block(B, C, cb_cands, block_bytes, hbm_step_bytes, budget):
    """Largest (bb, cb) under the VMEM budget; prefer a multi-step grid."""
    cb = 0
    for d in sorted(cb_cands):
        if block_bytes(1, d) <= budget:
            cb = d
    if cb == 0:
        cb = min(cb_cands)                # oversized plane; caller raises limit
    bb = 1
    for d in sorted(d for d in range(1, B + 1) if B % d == 0):
        if block_bytes(d, cb) <= budget:
            bb = d
    # Keep >=2 grid steps (v7x megacore: both TCs must issue DMAs) when each
    # step still moves a worthwhile amount of HBM traffic.
    if (B // bb) * (C // cb) < 2:
        for d in sorted((d for d in range(1, B) if B % d == 0), reverse=True):
            if hbm_step_bytes(d, cb) >= _MIN_STEP_HBM_BYTES:
                return d, cb
        for d in sorted((d for d in cb_cands if d < C), reverse=True):
            if hbm_step_bytes(bb, d) >= _MIN_STEP_HBM_BYTES:
                return bb, d
    return bb, cb


def _spt_kernel_flat(x_ref, o_ref, *, H, W, shift):
    """Lane-dense path (W < 128).

    x_ref: (bb, cb, H*W); o_ref: (bb, 5, cb, H*W).
    A 2-D roll by (sh, sw) on the flattened row-major plane decomposes into
    two flat rolls selected by a (flat_index mod W) mask:
        out[h*W + w] = rollN(F, sh*W + sw)[i]      if w >= sw
                     = rollN(F, sh*W + sw - W)[i]  otherwise
    """
    N = H * W
    x = x_ref[...]
    # Position within each W-row of the flattened plane (lane-axis iota).
    w_pos = jax.lax.broadcasted_iota(jnp.int32, x.shape, x.ndim - 1) % W
    o_ref[:, 0, :, :] = x
    pairs = ((shift, shift), (-shift, shift), (shift, -shift), (-shift, -shift))
    for k, (sh, sw) in enumerate(pairs, start=1):
        sh_n, sw_n = sh % H, sw % W
        if sw_n == 0:
            r = (sh_n * W) % N
            y = x if r == 0 else jnp.roll(x, r, axis=-1)
        else:
            hi = jnp.roll(x, (sh_n * W + sw_n) % N, axis=-1)
            lo = jnp.roll(x, (sh_n * W + sw_n - W) % N, axis=-1)
            y = jnp.where(w_pos >= sw_n, hi, lo)
        o_ref[:, k, :, :] = y


def _spt_kernel_2d(x_ref, o_ref, *, H, W, shift):
    """Wide path (W >= 128): x_ref (bb, cb, H, W); o_ref (bb, 5, cb, H, W)."""
    x = x_ref[...]
    o_ref[:, 0, :, :, :] = x
    pairs = ((shift, shift), (-shift, shift), (shift, -shift), (-shift, -shift))
    for k, (sh, sw) in enumerate(pairs, start=1):
        sh_n, sw_n = sh % H, sw % W
        y = x
        if sh_n:
            y = jnp.roll(y, sh_n, axis=-2)   # H roll (sublane axis)
        if sw_n:
            y = jnp.roll(y, sw_n, axis=-1)   # W roll (lane axis)
        o_ref[:, k, :, :, :] = y


def shifted_patch_tokenization(x, patch_size=16, shift_ratio=0.5):
    """x: (B, C, H, W) -> (B, 5*C, H, W), matching the PyTorch module."""
    B, C, H, W = x.shape
    shift = int(patch_size * shift_ratio)
    itemsize = jnp.dtype(x.dtype).itemsize
    budget, vmem_limit, vmem_total = _vmem_budget()

    lane_dense = W < _LANE
    if lane_dense:
        N = H * W
        # cb is the second-minor block dim on this path: must be a multiple of
        # 8 or the full channel extent.
        cb_cands = sorted({C} | {d for d in range(8, C + 1, 8) if C % d == 0})

        def block_bytes(bb, cb):
            # (1 in + 5 out) blocks, double-buffered, VMEM-padded footprint.
            return 12 * bb * _round_up(cb, _SUBLANE) * _round_up(N, _LANE) * itemsize
    else:
        cb_cands = sorted(d for d in range(1, C + 1) if C % d == 0)

        def block_bytes(bb, cb):
            return 12 * bb * cb * _round_up(H, _SUBLANE) * _round_up(W, _LANE) * itemsize

    def hbm_step_bytes(bb, cb):
        return 6 * bb * cb * H * W * itemsize

    bb, cb = _pick_block(B, C, cb_cands, block_bytes, hbm_step_bytes, budget)

    # Oversized-plane fallback: scale the VMEM limit with the actual working
    # set (leaving headroom for Mosaic internal scratch) instead of tripping
    # the generic cap.
    # TODO(synk): split H (with a `shift`-row halo) for planes too large for
    # even a single double-buffered block in VMEM.
    need = block_bytes(bb, cb)
    if need > budget:
        vmem_limit = min(int(need * 1.25) + (4 << 20), vmem_total - (8 << 20))
    vmem_limit = int(max(vmem_limit, 16 << 20))

    grid = (B // bb, C // cb)
    compiler_params = pltpu.CompilerParams(
        dimension_semantics=("parallel", "parallel"),
        vmem_limit_bytes=vmem_limit,
    )
    cost = pl.CostEstimate(
        flops=0, transcendentals=0,
        bytes_accessed=6 * B * C * H * W * itemsize,
    )

    if lane_dense:
        kernel = functools.partial(_spt_kernel_flat, H=H, W=W, shift=shift)
        out5 = pl.pallas_call(
            kernel,
            out_shape=jax.ShapeDtypeStruct((B, 5, C, N), x.dtype),
            grid_spec=pltpu.PrefetchScalarGridSpec(
                num_scalar_prefetch=0,
                grid=grid,
                in_specs=[pl.BlockSpec((bb, cb, N), lambda b, c: (b, c, 0))],
                out_specs=pl.BlockSpec((bb, 5, cb, N), lambda b, c: (b, 0, c, 0)),
            ),
            compiler_params=compiler_params,
            cost_estimate=cost,
        )(x.reshape(B, C, N))  # metadata-only merge of trailing contiguous dims
    else:
        kernel = functools.partial(_spt_kernel_2d, H=H, W=W, shift=shift)
        out5 = pl.pallas_call(
            kernel,
            out_shape=jax.ShapeDtypeStruct((B, 5, C, H, W), x.dtype),
            grid_spec=pltpu.PrefetchScalarGridSpec(
                num_scalar_prefetch=0,
                grid=grid,
                in_specs=[pl.BlockSpec((bb, cb, H, W), lambda b, c: (b, c, 0, 0))],
                out_specs=pl.BlockSpec((bb, 5, cb, H, W),
                                       lambda b, c: (b, 0, c, 0, 0)),
            ),
            compiler_params=compiler_params,
            cost_estimate=cost,
        )(x)

    # (B, 5, C, ...) -> (B, 5*C, H, W): merge/split of adjacent contiguous
    # dims — metadata-only reshape, reproduces torch.cat([...], dim=1) order.
    return out5.reshape(B, 5 * C, H, W)


def _reference(x, patch_size=16, shift_ratio=0.5):
    shift = int(patch_size * shift_ratio)
    imgs = [
        x,
        jnp.roll(x, (shift, shift), axis=(2, 3)),
        jnp.roll(x, (-shift, shift), axis=(2, 3)),
        jnp.roll(x, (shift, -shift), axis=(2, 3)),
        jnp.roll(x, (-shift, -shift), axis=(2, 3)),
    ]
    return jnp.concatenate(imgs, axis=1)


if __name__ == "__main__":
    key = jax.random.PRNGKey(0)
    B, C, H, W = 2, 4, 16, 16
    x = jax.random.normal(key, (B, C, H, W), dtype=jnp.float32)

    out = shifted_patch_tokenization(x, patch_size=16, shift_ratio=0.5)
    out = jax.block_until_ready(out)

    ref = _reference(x, patch_size=16, shift_ratio=0.5)
    assert out.shape == (B, 5 * C, H, W), out.shape
    assert out.dtype == x.dtype, out.dtype
    assert bool(jnp.array_equal(out, ref)), "Pallas SPT output mismatch vs reference"

    print("KERNEL_OK")
</pallas_src>

<mosaic_0001>
module attributes {stable_mosaic.version = 11 : i64} {
  func.func @_spt_kernel_flat(%arg0: i32, %arg1: i32, %arg2: memref<2x4x256xf32, #tpu.memory_space<vmem>>, %arg3: memref<2x5x4x256xf32, #tpu.memory_space<vmem>>) attributes {dimension_semantics = [#tpu.dimension_semantics<parallel>, #tpu.dimension_semantics<parallel>], iteration_bounds = array<i64: 1, 1>, scalar_prefetch = 0 : i64, scratch_operands = 0 : i64, tpu.core_type = #tpu.core_type<tc>, window_params = [{transform_indices = @transform_0, window_bounds = array<i64: 2, 4, 256>}, {transform_indices = @transform_1, window_bounds = array<i64: 2, 5, 4, 256>}]} {
    %c0 = arith.constant 0 : index
    %c0_0 = arith.constant 0 : index
    %c0_1 = arith.constant 0 : index
    %0 = vector.load %arg2[%c0, %c0_0, %c0_1] : memref<2x4x256xf32, #tpu.memory_space<vmem>>, vector<2x4x256xf32>
    %1 = tpu.iota {dimensions = array<i32: 2>} : vector<2x4x256xi32>
    %c16_i32 = arith.constant 16 : i32
    %c0_i32 = arith.constant 0 : i32
    %2 = arith.cmpi eq, %c16_i32, %c0_i32 : i32
    %c1_i32 = arith.constant 1 : i32
    %3 = arith.select %2, %c1_i32, %c16_i32 : i32
    %4 = vector.broadcast %3 : i32 to vector<2x4x256xi32>
    %5 = arith.remsi %1, %4 : vector<2x4x256xi32>
    %c0_i32_2 = arith.constant 0 : i32
    %6 = vector.broadcast %c0_i32_2 : i32 to vector<2x4x256xi32>
    %7 = arith.cmpi ne, %5, %6 : vector<2x4x256xi32>
    %c0_i32_3 = arith.constant 0 : i32
    %8 = vector.broadcast %c0_i32_3 : i32 to vector<2x4x256xi32>
    %9 = arith.cmpi slt, %5, %8 : vector<2x4x256xi32>
    %c0_i32_4 = arith.constant 0 : i32
    %10 = arith.cmpi slt, %3, %c0_i32_4 : i32
    %11 = vector.broadcast %10 : i1 to vector<2x4x256xi1>
    %12 = vector.broadcast %11 : vector<2x4x256xi1> to vector<2x4x256xi1>
    %13 = arith.xori %9, %12 : vector<2x4x256xi1>
    %14 = arith.andi %13, %7 : vector<2x4x256xi1>
    %15 = vector.broadcast %3 : i32 to vector<2x4x256xi32>
    %16 = arith.addi %5, %15 : vector<2x4x256xi32>
    %17 = arith.select %14, %16, %5 : vector<2x4x256xi1>, vector<2x4x256xi32>
    %c0_5 = arith.constant 0 : index
    %c0_6 = arith.constant 0 : index
    %c0_7 = arith.constant 0 : index
    %c0_8 = arith.constant 0 : index
    %18 = vector.load %arg3[%c0_5, %c0_6, %c0_7, %c0_8] : memref<2x5x4x256xf32, #tpu.memory_space<vmem>>, vector<2x1x4x256xf32>
    %19 = vector.shape_cast %18 : vector<2x1x4x256xf32> to vector<2x4x256xf32>
    %20 = vector.shape_cast %0 : vector<2x4x256xf32> to vector<2x1x4x256xf32>
    tpu.vector_store %arg3[%c0_5, %c0_6, %c0_7, %c0_8], %20 {strides = array<i32>} : memref<2x5x4x256xf32, #tpu.memory_space<vmem>>, vector<2x1x4x256xf32>,
    %21 = vector.extract_strided_slice %0 {offsets = [0, 0, 120], sizes = [2, 4, 136], strides = [1, 1, 1]} : vector<2x4x256xf32> to vector<2x4x136xf32>
    %22 = vector.extract_strided_slice %0 {offsets = [0, 0, 0], sizes = [2, 4, 120], strides = [1, 1, 1]} : vector<2x4x256xf32> to vector<2x4x120xf32>
    %23 = tpu.concatenate %21, %22 in 2 : vector<2x4x136xf32>, vector<2x4x120xf32> -> vector<2x4x256xf32>
    %24 = vector.extract_strided_slice %0 {offsets = [0, 0, 136], sizes = [2, 4, 120], strides = [1, 1, 1]} : vector<2x4x256xf32> to vector<2x4x120xf32>
    %25 = vector.extract_strided_slice %0 {offsets = [0, 0, 0], sizes = [2, 4, 136], strides = [1, 1, 1]} : vector<2x4x256xf32> to vector<2x4x136xf32>
    %26 = tpu.concatenate %24, %25 in 2 : vector<2x4x120xf32>, vector<2x4x136xf32> -> vector<2x4x256xf32>
    %c8_i32 = arith.constant 8 : i32
    %27 = vector.broadcast %c8_i32 : i32 to vector<2x4x256xi32>
    %28 = arith.cmpi sge, %17, %27 : vector<2x4x256xi32>
    %29 = arith.select %28, %23, %26 : vector<2x4x256xi1>, vector<2x4x256xf32>
    %c0_9 = arith.constant 0 : index
    %c1 = arith.constant 1 : index
    %c0_10 = arith.constant 0 : index
    %c0_11 = arith.constant 0 : index
    %30 = vector.load %arg3[%c0_9, %c1, %c0_10, %c0_11] : memref<2x5x4x256xf32, #tpu.memory_space<vmem>>, vector<2x1x4x256xf32>
    %31 = vector.shape_cast %30 : vector<2x1x4x256xf32> to vector<2x4x256xf32>
    %32 = vector.shape_cast %29 : vector<2x4x256xf32> to vector<2x1x4x256xf32>
    tpu.vector_store %arg3[%c0_9, %c1, %c0_10, %c0_11], %32 {strides = array<i32>} : memref<2x5x4x256xf32, #tpu.memory_space<vmem>>, vector<2x1x4x256xf32>,
    %33 = vector.extract_strided_slice %0 {offsets = [0, 0, 120], sizes = [2, 4, 136], strides = [1, 1, 1]} : vector<2x4x256xf32> to vector<2x4x136xf32>
    %34 = vector.extract_strided_slice %0 {offsets = [0, 0, 0], sizes = [2, 4, 120], strides = [1, 1, 1]} : vector<2x4x256xf32> to vector<2x4x120xf32>
    %35 = tpu.concatenate %33, %34 in 2 : vector<2x4x136xf32>, vector<2x4x120xf32> -> vector<2x4x256xf32>
    %36 = vector.extract_strided_slice %0 {offsets = [0, 0, 136], sizes = [2, 4, 120], strides = [1, 1, 1]} : vector<2x4x256xf32> to vector<2x4x120xf32>
    %37 = vector.extract_strided_slice %0 {offsets = [0, 0, 0], sizes = [2, 4, 136], strides = [1, 1, 1]} : vector<2x4x256xf32> to vector<2x4x136xf32>
    %38 = tpu.concatenate %36, %37 in 2 : vector<2x4x120xf32>, vector<2x4x136xf32> -> vector<2x4x256xf32>
    %c8_i32_12 = arith.constant 8 : i32
    %39 = vector.broadcast %c8_i32_12 : i32 to vector<2x4x256xi32>
    %40 = arith.cmpi sge, %17, %39 : vector<2x4x256xi32>
    %41 = arith.select %40, %35, %38 : vector<2x4x256xi1>, vector<2x4x256xf32>
    %c0_13 = arith.constant 0 : index
    %c2 = arith.constant 2 : index
    %c0_14 = arith.constant 0 : index
    %c0_15 = arith.constant 0 : index
    %42 = vector.load %arg3[%c0_13, %c2, %c0_14, %c0_15] : memref<2x5x4x256xf32, #tpu.memory_space<vmem>>, vector<2x1x4x256xf32>
    %43 = vector.shape_cast %42 : vector<2x1x4x256xf32> to vector<2x4x256xf32>
    %44 = vector.shape_cast %41 : vector<2x4x256xf32> to vector<2x1x4x256xf32>
    tpu.vector_store %arg3[%c0_13, %c2, %c0_14, %c0_15], %44 {strides = array<i32>} : memref<2x5x4x256xf32, #tpu.memory_space<vmem>>, vector<2x1x4x256xf32>,
    %45 = vector.extract_strided_slice %0 {offsets = [0, 0, 120], sizes = [2, 4, 136], strides = [1, 1, 1]} : vector<2x4x256xf32> to vector<2x4x136xf32>
    %46 = vector.extract_strided_slice %0 {offsets = [0, 0, 0], sizes = [2, 4, 120], strides = [1, 1, 1]} : vector<2x4x256xf32> to vector<2x4x120xf32>
    %47 = tpu.concatenate %45, %46 in 2 : vector<2x4x136xf32>, vector<2x4x120xf32> -> vector<2x4x256xf32>
    %48 = vector.extract_strided_slice %0 {offsets = [0, 0, 136], sizes = [2, 4, 120], strides = [1, 1, 1]} : vector<2x4x256xf32> to vector<2x4x120xf32>
    %49 = vector.extract_strided_slice %0 {offsets = [0, 0, 0], sizes = [2, 4, 136], strides = [1, 1, 1]} : vector<2x4x256xf32> to vector<2x4x136xf32>
    %50 = tpu.concatenate %48, %49 in 2 : vector<2x4x120xf32>, vector<2x4x136xf32> -> vector<2x4x256xf32>
    %c8_i32_16 = arith.constant 8 : i32
    %51 = vector.broadcast %c8_i32_16 : i32 to vector<2x4x256xi32>
    %52 = arith.cmpi sge, %17, %51 : vector<2x4x256xi32>
    %53 = arith.select %52, %47, %50 : vector<2x4x256xi1>, vector<2x4x256xf32>
    %c0_17 = arith.constant 0 : index
    %c3 = arith.constant 3 : index
    %c0_18 = arith.constant 0 : index
    %c0_19 = arith.constant 0 : index
    %54 = vector.load %arg3[%c0_17, %c3, %c0_18, %c0_19] : memref<2x5x4x256xf32, #tpu.memory_space<vmem>>, vector<2x1x4x256xf32>
    %55 = vector.shape_cast %54 : vector<2x1x4x256xf32> to vector<2x4x256xf32>
    %56 = vector.shape_cast %53 : vector<2x4x256xf32> to vector<2x1x4x256xf32>
    tpu.vector_store %arg3[%c0_17, %c3, %c0_18, %c0_19], %56 {strides = array<i32>} : memref<2x5x4x256xf32, #tpu.memory_space<vmem>>, vector<2x1x4x256xf32>,
    %57 = vector.extract_strided_slice %0 {offsets = [0, 0, 120], sizes = [2, 4, 136], strides = [1, 1, 1]} : vector<2x4x256xf32> to vector<2x4x136xf32>
    %58 = vector.extract_strided_slice %0 {offsets = [0, 0, 0], sizes = [2, 4, 120], strides = [1, 1, 1]} : vector<2x4x256xf32> to vector<2x4x120xf32>
    %59 = tpu.concatenate %57, %58 in 2 : vector<2x4x136xf32>, vector<2x4x120xf32> -> vector<2x4x256xf32>
    %60 = vector.extract_strided_slice %0 {offsets = [0, 0, 136], sizes = [2, 4, 120], strides = [1, 1, 1]} : vector<2x4x256xf32> to vector<2x4x120xf32>
    %61 = vector.extract_strided_slice %0 {offsets = [0, 0, 0], sizes = [2, 4, 136], strides = [1, 1, 1]} : vector<2x4x256xf32> to vector<2x4x136xf32>
    %62 = tpu.concatenate %60, %61 in 2 : vector<2x4x120xf32>, vector<2x4x136xf32> -> vector<2x4x256xf32>
    %c8_i32_20 = arith.constant 8 : i32
    %63 = vector.broadcast %c8_i32_20 : i32 to vector<2x4x256xi32>
    %64 = arith.cmpi sge, %17, %63 : vector<2x4x256xi32>
    %65 = arith.select %64, %59, %62 : vector<2x4x256xi1>, vector<2x4x256xf32>
    %c0_21 = arith.constant 0 : index
    %c4 = arith.constant 4 : index
    %c0_22 = arith.constant 0 : index
    %c0_23 = arith.constant 0 : index
    %66 = vector.load %arg3[%c0_21, %c4, %c0_22, %c0_23] : memref<2x5x4x256xf32, #tpu.memory_space<vmem>>, vector<2x1x4x256xf32>
    %67 = vector.shape_cast %66 : vector<2x1x4x256xf32> to vector<2x4x256xf32>
    %68 = vector.shape_cast %65 : vector<2x4x256xf32> to vector<2x1x4x256xf32>
    tpu.vector_store %arg3[%c0_21, %c4, %c0_22, %c0_23], %68 {strides = array<i32>} : memref<2x5x4x256xf32, #tpu.memory_space<vmem>>, vector<2x1x4x256xf32>,
    return
  }
  func.func @transform_0(%arg0: i32, %arg1: i32) -> (i32, i32, i32) {
    %c0_i32 = arith.constant 0 : i32
    %c0_i32_0 = arith.constant 0 : i32
    return %arg0, %arg1, %c0_i32 : i32, i32, i32
  }
  func.func @transform_1(%arg0: i32, %arg1: i32) -> (i32, i32, i32, i32) {
    %c0_i32 = arith.constant 0 : i32
    %c0_i32_0 = arith.constant 0 : i32
    %c0_i32_1 = arith.constant 0 : i32
    return %arg0, %c0_i32, %arg1, %c0_i32_0 : i32, i32, i32, i32
  }
}

</mosaic_0001>

<llo_original>
// kernel: tpu_custom_call.1
$region0: #{tpu_custom_call.1}
  #allocation0 [shape = 'u32[]', space=smem, size = 0x4, offset = 0x4, fixed_abs, tag = 'smem constant byte address 0x4 - core index']
  #allocation1 [shape = 'u32[72,128]{1,0:T(1,128)}', space=vmem, size = 0x9000, scoped, tag = 'internal scratch']
  %s0 = inlined_call_operand.hbm [shape: f32[2,4,256], index: 0, kind: input, shape index: {}]
  %s1 = inlined_call_operand.hbm [shape: f32[2,5,4,256], index: 1, kind: output, shape index: {}]
  %s2 = sld [smem:[#allocation0]]
  $region18: #{tpu_custom_call.1} parent=0
    _
  %s4 = ssub.s32 1, %s2
  %s5 = scalar_select 0, %s4, %s2
  $region1: #{tpu_custom_call.1} parent=0
    #allocation2 [shape = 'u8[8192]{0}', space=vmem, size = 0x2000, scoped, tag = 'input window, operand 0, single buffered']
    #allocation3 [shape = 's32[1]{0}', space=sflag, size = 0x4, scoped, tag = 'scoped memory for tpu_custom_call.1']
    #allocation4 [shape = 's32[1]{0}', space=sflag, size = 0x4, scoped, tag = 'scoped memory for tpu_custom_call.1']
    #allocation5 [shape = 'u8[40960]{0}', space=vmem, size = 0xa000, scoped, tag = 'output window, operand 0, single buffered']
    %6 = vsyncpa [#allocation3], 0
    %7 = vsyncpa [#allocation4], 0
    // Predicated region
    $region2: #{tpu_custom_call.1} parent=1 // pred_check
      _
    $region3: #{tpu_custom_call.1} parent=1 // pred_check_branch
      %9 = sbr.rel (0) target = $region5
    $region4: #{tpu_custom_call.1} parent=1 // pred_region
      %11 = vsyncadd [#allocation3], 0
      %s12 = sshll.u32 %s0, 4
      %s13 = int_to_ptr.hbm [resolvable:$true] %s12
      %s14 = sshll.u32 [#allocation2], 4
      %s15 = int_to_ptr.vmem [resolvable:$true] %s14
      %20 = dma.hbm_to_vmem [thread:$0]  %s13, 256, %s15, [#allocation3], 128, 128, 8
    $region5: #{tpu_custom_call.1} parent=1 // pred_fallthru
      _
    // Predicated region
    $region6: #{tpu_custom_call.1} parent=1 // pred_check
      _
    $region7: #{tpu_custom_call.1} parent=1 // pred_check_branch
      %22 = sbr.rel (0) target = $region9
    $region8: #{tpu_custom_call.1} parent=1 // pred_region
      %24 = dma.done [#allocation3], 256
    $region9: #{tpu_custom_call.1} parent=1 // pred_fallthru
      _
    %v25 = vld [vmem:[#allocation2] sm:$0xff]
    %v26 = vld [vmem:[#allocation2 + $0x8] sm:$0xff]
    %v27 = vlaneseq
    %v28 = vand.u32 %v27, 127
    %v29 = vadd.s32 %v28, 128
    %vm30 = vcmp.lt.s32.totalorder %v28, 0
    %v31 = vsub.s32 0, %v28
    %v32 = vsel %vm30, %v31, %v28
    %v33 = vshrl.u32 %v32, 4
    %v34 = vand.u32 %v32, 15
    %v35 = vsub.s32 0, %v34
    %v36 = vsel %vm30, %v35, %v34
    %vm37 = vcmp.lt.s32.totalorder %v29, 0
    %v38 = vsub.s32 0, %v29
    %v39 = vsel %vm37, %v38, %v29
    %v40 = vshrl.u32 %v39, 4
    %v41 = vand.u32 %v39, 15
    %v42 = vsub.s32 0, %v41
    %v43 = vsel %vm37, %v42, %v41
    %vm44 = vcmp.ne.s32.totalorder %v36, 0
    %vm45 = vcmp.ne.s32.totalorder %v43, 0
    %vm46 = vcmp.lt.s32.totalorder %v36, 0
    %vm47 = vcmp.lt.s32.totalorder %v43, 0
    %vm48 = vmand %vm46, %vm44
    %vm49 = vmand %vm47, %vm45
    %v50 = vadd.s32 %v36, 16
    %v51 = vadd.s32 %v43, 16
    %v52 = vsel %vm48, %v50, %v36
    %v53 = vsel %vm49, %v51, %v43
    %54 = vst [vmem:[#allocation5] sm:$0xff] %v25
    %55 = vst [vmem:[#allocation5 + $0x28] sm:$0xff] %v26
    %58 = vst [vmem:[#allocation1] ss:$2 sm:$0xff] %v25
    %v59 = vld.sshfl [vmem:[#allocation1] sm:$0xff pattern:$0x75316420]
    %v60 = vld.sshfl [vmem:[#allocation1 + $0x8] sm:$0xff pattern:$0x75316420]
    %s61 = scalar_lea.vmem [#allocation1], 16
    %62 = vst [vmem:[%s61] ss:$2 sm:$0xff] %v26
    %v63 = vld.sshfl [vmem:[#allocation1 + $0x10] sm:$0xff pattern:$0x75316420]
    %v64 = vld.sshfl [vmem:[#allocation1 + $0x18] sm:$0xff pattern:$0x75316420]
    %65 = vrot.lane.b32.xlu0 %v59, 8
    %v66 = vpop.permute.xlu0 %65
    %67 = vrot.lane.b32.xlu0 %v60, 8
    %v68 = vpop.permute.xlu0 %67
    %69 = vrot.lane.b32.xlu0 %v63, 8
    %v70 = vpop.permute.xlu0 %69
    %71 = vrot.lane.b32.xlu0 %v64, 8
    %v72 = vpop.permute.xlu0 %71
    %vm73 = vcmask 64512
    %v74 = vsel %vm73, %v66, %v68
    %v75 = vsel %vm73, %v70, %v72
    %80 = vst [vmem:[#allocation1] ss:$2 sm:$0xff] %v25
    %v81 = vld.sshfl [vmem:[#allocation1] sm:$0xff pattern:$0x75316420]
    %s82 = scalar_lea.vmem [#allocation1], 16
    %83 = vst [vmem:[%s82] ss:$2 sm:$0xff] %v26
    %v84 = vld.sshfl [vmem:[#allocation1 + $0x10] sm:$0xff pattern:$0x75316420]
    %85 = vrot.lane.b32.xlu0 %v81, 8
    %v86 = vpop.permute.xlu0 %85
    %87 = vrot.lane.b32.xlu0 %v84, 8
    %v88 = vpop.permute.xlu0 %87
    %v91 = vsel %vm73, %v68, %v86
    %v92 = vsel %vm73, %v72, %v88
    %93 = vst [vmem:[#allocation1] ss:$2 sm:$0xff] %v25
    %v94 = vld.sshfl [vmem:[#allocation1 + $0x8] sm:$0xff pattern:$0x75316420]
    %s95 = scalar_lea.vmem [#allocation1], 16
    %96 = vst [vmem:[%s95] ss:$2 sm:$0xff] %v26
    %v97 = vld.sshfl [vmem:[#allocation1 + $0x18] sm:$0xff pattern:$0x75316420]
    %98 = vrot.lane.b32.xlu0 %v94, 120
    %v99 = vpop.permute.xlu0 %98
    %100 = vrot.lane.b32.xlu0 %v97, 120
    %v101 = vpop.permute.xlu0 %100
    %104 = vst [vmem:[#allocation1] ss:$2 sm:$0xff] %v25
    %v105 = vld.sshfl [vmem:[#allocation1] sm:$0xff pattern:$0x75316420]
    %v106 = vld.sshfl [vmem:[#allocation1 + $0x8] sm:$0xff pattern:$0x75316420]
    %s107 = scalar_lea.vmem [#allocation1], 16
    %108 = vst [vmem:[%s107] ss:$2 sm:$0xff] %v26
    %v109 = vld.sshfl [vmem:[#allocation1 + $0x10] sm:$0xff pattern:$0x75316420]
    %v110 = vld.sshfl [vmem:[#allocation1 + $0x18] sm:$0xff pattern:$0x75316420]
    %111 = vrot.lane.b32.xlu0 %v105, 120
    %v112 = vpop.permute.xlu0 %111
    %113 = vrot.lane.b32.xlu0 %v106, 120
    %v114 = vpop.permute.xlu0 %113
    %115 = vrot.lane.b32.xlu0 %v109, 120
    %v116 = vpop.permute.xlu0 %115
    %117 = vrot.lane.b32.xlu0 %v110, 120
    %v118 = vpop.permute.xlu0 %117
    %vm119 = vcmask 982016
    %v120 = vsel %vm119, %v112, %v114
    %v121 = vsel %vm119, %v116, %v118
    %v126 = vsel %vm119, %v99, %v112
    %v127 = vsel %vm119, %v101, %v116
    %vm128 = vcmp.ge.s32.totalorder %v52, 8
    %vm129 = vcmp.ge.s32.totalorder %v53, 8
    %v130 = vsel %vm128, %v74, %v126
    %v131 = vsel %vm129, %v91, %v120
    %v132 = vsel %vm128, %v75, %v127
    %v133 = vsel %vm129, %v92, %v121
    %v138 = vrot.slane %v131, 4
    %v139 = vrot.slane %v133, 4
    %vm140 = vcmask 1043456
    %v141 = vsel %vm140, %v130, %v138
    %v142 = vsel %vm140, %v132, %v139
    %s145 = scalar_lea.vmem [#allocation5], 8
    %146 = vst [vmem:[%s145] sm:$0xff] %v141
    %147 = vst [vmem:[%s145 + $0x28] sm:$0xff] %v142
    %s148 = scalar_lea.vmem [#allocation5], 16
    %149 = vst [vmem:[%s148] sm:$0xff] %v141
    %150 = vst [vmem:[%s148 + $0x28] sm:$0xff] %v142
    %s151 = scalar_lea.vmem [#allocation5], 24
    %152 = vst [vmem:[%s151] sm:$0xff] %v141
    %153 = vst [vmem:[%s151 + $0x28] sm:$0xff] %v142
    %s154 = scalar_lea.vmem [#allocation5], 32
    %155 = vst [vmem:[%s154] sm:$0xff] %v141
    %156 = vst [vmem:[%s154 + $0x28] sm:$0xff] %v142
    // Predicated region
    $region10: #{tpu_custom_call.1} parent=1 // pred_check
      _
    $region11: #{tpu_custom_call.1} parent=1 // pred_check_branch
      %158 = sbr.rel (0) target = $region13
    $region12: #{tpu_custom_call.1} parent=1 // pred_region
      %160 = vsyncadd [#allocation4], 0
      %s161 = sshll.u32 [#allocation5], 4
      %s162 = int_to_ptr.vmem [resolvable:$true] %s161
      %s163 = sshll.u32 %s1, 4
      %s164 = int_to_ptr.hbm [resolvable:$true] %s163
      %169 = dma.vmem_to_hbm [thread:$0]  %s162, 1280, %s164, [#allocation4], 128, 128, 8
    $region13: #{tpu_custom_call.1} parent=1 // pred_fallthru
      _
    // Predicated region
    $region14: #{tpu_custom_call.1} parent=1 // pred_check
      _
    $region15: #{tpu_custom_call.1} parent=1 // pred_check_branch
      %171 = sbr.rel (0) target = $region17
    $region16: #{tpu_custom_call.1} parent=1 // pred_region
      %173 = dma.done [#allocation4], 1280
    $region17: #{tpu_custom_call.1} parent=1 // pred_fallthru
      _
    %174 = vsyncpa [#allocation3], 1
    %175 = vsyncpa [#allocation4], 1

</llo_original>
